<compile_context>
chip_gen: v7x
topology: tpu7x:2x2x1
jax: 0.10.0
libtpu: 0.0.40
codegen_flags: <defaults>
</compile_context>

<pallas_src>
import jax
import jax.numpy as jnp
from jax.experimental import pallas as pl
from jax.experimental.pallas import tpu as pltpu

BN_EPS = 1e-5


def couplerp_kernel(z_ref, w1t_ref, vecs_ref, wh_ref, bh_ref, out_ref):
    """Fused fc1 + BatchNorm1d(train) + ReLU + [fc_mean | fc_log_var | pad].

    z_ref   : [B, D]     input
    w1t_ref : [D, D]     fc1 weight, pre-transposed to [in, out]
    vecs_ref: [3, D]     row 0 = fc1 bias, row 1 = BN gamma, row 2 = BN beta
    wh_ref  : [D, Npad]  fused head weights ([:, :D]=mean, [:, D:2D]=log_var, rest 0)
    bh_ref  : [1, Npad]  fused head biases (zero-padded)
    out_ref : [B, Npad]  fused output (lane-dense, padded to 128-lane multiple)
    """
    z = z_ref[...]                                            # [B, D] f32

    # fc1: Linear(z_dim, z_dim); weights already in [K, N] orientation.
    h_pre = jnp.dot(z, w1t_ref[...],
                    preferred_element_type=jnp.float32) + vecs_ref[0:1, :]

    # BatchNorm1d (training mode): batch statistics, biased variance.
    # Single pass over the tile: E[x] and E[x^2] via two sublane reductions.
    inv_b = 1.0 / z.shape[0]
    mu = jnp.sum(h_pre, axis=0, keepdims=True) * inv_b            # [1, D]
    ex2 = jnp.sum(h_pre * h_pre, axis=0, keepdims=True) * inv_b   # [1, D]
    var = jnp.maximum(ex2 - mu * mu, 0.0)                         # biased var
    inv_std = jax.lax.rsqrt(var + BN_EPS)                         # EUP slot

    # Fold the BN affine into one scale/shift FMA: h_bn = h_pre*scale + shift.
    scale = vecs_ref[1:2, :] * inv_std                            # gamma / std
    shift = vecs_ref[2:3, :] - mu * scale                         # beta - mu*scale
    h = jnp.maximum(h_pre * scale + shift, 0.0)                   # BN + ReLU

    # Both heads in one MXU matmul; lane-dense (padded) output store.
    out_ref[...] = jnp.dot(h, wh_ref[...],
                           preferred_element_type=jnp.float32) + bh_ref[...]


def prepare_params(params):
    """One-time layout prep (NOT on the per-step hot path).

    - fc1 / head weights transposed to [in, out] so the kernel never transposes.
    - fc_mean & fc_log_var fused into one weight/bias, zero-padded so the output
      last dim is a multiple of 128 lanes (unmasked vst in the kernel).
    - The three tiny [1, D] vectors packed into one [3, D] operand.
    """
    D = params["w1"].shape[0]
    w1t = jnp.asarray(params["w1"]).T                                    # [D, D]
    wh = jnp.concatenate([params["wm"].T, params["wv"].T], axis=1)       # [D, 2D]
    bh = jnp.concatenate([params["bm"], params["bv"]], axis=1)           # [1, 2D]

    n_out = 2 * D
    n_pad = max(128, ((n_out + 127) // 128) * 128)
    if n_pad > n_out:
        wh = jnp.pad(wh, ((0, 0), (0, n_pad - n_out)))
        bh = jnp.pad(bh, ((0, 0), (0, n_pad - n_out)))

    vecs = jnp.concatenate([params["b1"], params["gamma"], params["beta"]],
                           axis=0)                                       # [3, D]
    return {"w1t": w1t, "vecs": vecs, "wh": wh, "bh": bh}


def couplerp_forward(z, prep):
    """Hot path: a single pallas_call; returns (mean, log_var)."""
    B = z.shape[0]
    D = prep["w1t"].shape[0]
    n_pad = prep["wh"].shape[1]

    vmem = pl.BlockSpec(memory_space=pltpu.MemorySpace.VMEM)

    flops = 2 * B * D * D + 2 * B * D * n_pad            # fc1 + fused heads
    bytes_accessed = 4 * (B * D              # z
                          + D * D            # w1t
                          + 3 * D            # vecs
                          + D * n_pad        # wh
                          + n_pad            # bh
                          + B * n_pad)       # out
    cost = pl.CostEstimate(flops=flops, transcendentals=D,
                           bytes_accessed=bytes_accessed)

    out = pl.pallas_call(
        couplerp_kernel,
        out_shape=jax.ShapeDtypeStruct((B, n_pad), jnp.float32),
        in_specs=[vmem] * 5,
        out_specs=vmem,
        cost_estimate=cost,
    )(z, prep["w1t"], prep["vecs"], prep["wh"], prep["bh"])

    return out[:, :D], out[:, D:2 * D]


def init_params(key, z_dim):
    """PyTorch-layout parameters (nn.Linear: weight [out, in], bias [out])."""
    ks = jax.random.split(key, 6)
    scale = 1.0 / jnp.sqrt(z_dim)   # matches nn.Linear uniform bound scale
    def lin(kw, kb):
        w = jax.random.uniform(kw, (z_dim, z_dim), jnp.float32, -scale, scale)
        b = jax.random.uniform(kb, (1, z_dim), jnp.float32, -scale, scale)
        return w, b
    w1, b1 = lin(ks[0], ks[1])
    wm, bm = lin(ks[2], ks[3])
    wv, bv = lin(ks[4], ks[5])
    return {
        "w1": w1, "b1": b1,
        # BatchNorm1d default affine init: weight=1, bias=0
        "gamma": jnp.ones((1, z_dim), jnp.float32),
        "beta": jnp.zeros((1, z_dim), jnp.float32),
        "wm": wm, "bm": bm,
        "wv": wv, "bv": bv,
    }


def reference_forward(z, p):
    """Pure-JAX reference reproducing the PyTorch forward (BN training mode)."""
    h_pre = z @ p["w1"].T + p["b1"]
    mu = jnp.mean(h_pre, axis=0, keepdims=True)
    var = jnp.mean((h_pre - mu) ** 2, axis=0, keepdims=True)
    h = jnp.maximum((h_pre - mu) / jnp.sqrt(var + BN_EPS) * p["gamma"] + p["beta"], 0.0)
    return h @ p["wm"].T + p["bm"], h @ p["wv"].T + p["bv"]


if __name__ == "__main__":
    B, Z_DIM = 8, 32
    key = jax.random.PRNGKey(0)
    kz, kp = jax.random.split(key)
    z = jax.random.normal(kz, (B, Z_DIM), jnp.float32)
    params = init_params(kp, Z_DIM)

    prep = prepare_params(params)                 # one-time layout prep
    mean, log_var = couplerp_forward(z, prep)     # fused Pallas kernel
    jax.block_until_ready((mean, log_var))

    mean_ref, logvar_ref = reference_forward(z, params)
    assert mean.shape == (B, Z_DIM) and log_var.shape == (B, Z_DIM)
    assert jnp.allclose(mean, mean_ref, atol=1e-4, rtol=1e-4)
    assert jnp.allclose(log_var, logvar_ref, atol=1e-4, rtol=1e-4)
    print("KERNEL_OK")
</pallas_src>

<mosaic_0001>
module attributes {stable_mosaic.version = 11 : i64} {
  func.func @couplerp_kernel(%arg0: memref<8x32xf32, #tpu.memory_space<vmem>>, %arg1: memref<32x32xf32, #tpu.memory_space<vmem>>, %arg2: memref<3x32xf32, #tpu.memory_space<vmem>>, %arg3: memref<32x128xf32, #tpu.memory_space<vmem>>, %arg4: memref<1x128xf32, #tpu.memory_space<vmem>>, %arg5: memref<8x128xf32, #tpu.memory_space<vmem>>) attributes {dimension_semantics = [], scalar_prefetch = 0 : i64, scratch_operands = 0 : i64, tpu.core_type = #tpu.core_type<tc>} {
    %c0 = arith.constant 0 : index
    %c0_0 = arith.constant 0 : index
    %0 = vector.load %arg0[%c0, %c0_0] : memref<8x32xf32, #tpu.memory_space<vmem>>, vector<8x32xf32>
    %c0_1 = arith.constant 0 : index
    %c0_2 = arith.constant 0 : index
    %1 = vector.load %arg1[%c0_1, %c0_2] : memref<32x32xf32, #tpu.memory_space<vmem>>, vector<32x32xf32>
    %cst = arith.constant dense<0.000000e+00> : vector<8x32xf32>
    %2 = tpu.matmul %0, %1, %cst {dimension_numbers = #tpu.dot_dimension_numbers<[1], [0], [0], [1], [0, 0, 1, 1], [], []>} : vector<8x32xf32>, vector<32x32xf32>, vector<8x32xf32> -> vector<8x32xf32>
    %c0_3 = arith.constant 0 : index
    %c0_4 = arith.constant 0 : index
    %3 = vector.load %arg2[%c0_3, %c0_4] : memref<3x32xf32, #tpu.memory_space<vmem>>, vector<1x32xf32>
    %4 = vector.broadcast %3 : vector<1x32xf32> to vector<8x32xf32>
    %5 = arith.addf %2, %4 : vector<8x32xf32>
    %cst_5 = arith.constant dense<0.000000e+00> : vector<32xf32>
    %6 = vector.multi_reduction <add>, %5, %cst_5 [0] : vector<8x32xf32> to vector<32xf32>
    %7 = vector.shape_cast %6 : vector<32xf32> to vector<1x32xf32>
    %cst_6 = arith.constant 1.250000e-01 : f32
    %8 = vector.broadcast %cst_6 : f32 to vector<1x32xf32>
    %9 = arith.mulf %7, %8 : vector<1x32xf32>
    %10 = arith.mulf %5, %5 : vector<8x32xf32>
    %cst_7 = arith.constant dense<0.000000e+00> : vector<32xf32>
    %11 = vector.multi_reduction <add>, %10, %cst_7 [0] : vector<8x32xf32> to vector<32xf32>
    %12 = vector.shape_cast %11 : vector<32xf32> to vector<1x32xf32>
    %cst_8 = arith.constant 1.250000e-01 : f32
    %13 = vector.broadcast %cst_8 : f32 to vector<1x32xf32>
    %14 = arith.mulf %12, %13 : vector<1x32xf32>
    %15 = arith.mulf %9, %9 : vector<1x32xf32>
    %16 = arith.subf %14, %15 : vector<1x32xf32>
    %cst_9 = arith.constant 0.000000e+00 : f32
    %17 = vector.broadcast %cst_9 : f32 to vector<1x32xf32>
    %18 = arith.maximumf %16, %17 : vector<1x32xf32>
    %cst_10 = arith.constant 9.99999974E-6 : f32
    %19 = vector.broadcast %cst_10 : f32 to vector<1x32xf32>
    %20 = arith.addf %18, %19 : vector<1x32xf32>
    %21 = math.rsqrt %20 : vector<1x32xf32>
    %c1 = arith.constant 1 : index
    %c0_11 = arith.constant 0 : index
    %22 = vector.load %arg2[%c1, %c0_11] : memref<3x32xf32, #tpu.memory_space<vmem>>, vector<1x32xf32>
    %23 = arith.mulf %22, %21 : vector<1x32xf32>
    %c2 = arith.constant 2 : index
    %c0_12 = arith.constant 0 : index
    %24 = vector.load %arg2[%c2, %c0_12] : memref<3x32xf32, #tpu.memory_space<vmem>>, vector<1x32xf32>
    %25 = arith.mulf %9, %23 : vector<1x32xf32>
    %26 = arith.subf %24, %25 : vector<1x32xf32>
    %27 = vector.broadcast %23 : vector<1x32xf32> to vector<8x32xf32>
    %28 = arith.mulf %5, %27 : vector<8x32xf32>
    %29 = vector.broadcast %26 : vector<1x32xf32> to vector<8x32xf32>
    %30 = arith.addf %28, %29 : vector<8x32xf32>
    %cst_13 = arith.constant 0.000000e+00 : f32
    %31 = vector.broadcast %cst_13 : f32 to vector<8x32xf32>
    %32 = arith.maximumf %30, %31 : vector<8x32xf32>
    %c0_14 = arith.constant 0 : index
    %c0_15 = arith.constant 0 : index
    %33 = vector.load %arg3[%c0_14, %c0_15] : memref<32x128xf32, #tpu.memory_space<vmem>>, vector<32x128xf32>
    %cst_16 = arith.constant dense<0.000000e+00> : vector<8x128xf32>
    %34 = tpu.matmul %32, %33, %cst_16 {dimension_numbers = #tpu.dot_dimension_numbers<[1], [0], [0], [1], [0, 0, 1, 1], [], []>} : vector<8x32xf32>, vector<32x128xf32>, vector<8x128xf32> -> vector<8x128xf32>
    %c0_17 = arith.constant 0 : index
    %c0_18 = arith.constant 0 : index
    %35 = vector.load %arg4[%c0_17, %c0_18] : memref<1x128xf32, #tpu.memory_space<vmem>>, vector<1x128xf32>
    %36 = vector.broadcast %35 : vector<1x128xf32> to vector<8x128xf32>
    %37 = arith.addf %34, %36 : vector<8x128xf32>
    %c0_19 = arith.constant 0 : index
    %c0_20 = arith.constant 0 : index
    %38 = vector.load %arg5[%c0_19, %c0_20] : memref<8x128xf32, #tpu.memory_space<vmem>>, vector<8x128xf32>
    tpu.vector_store %arg5[%c0_19, %c0_20], %37 {strides = array<i32>} : memref<8x128xf32, #tpu.memory_space<vmem>>, vector<8x128xf32>,
    return
  }
}

</mosaic_0001>

<llo_original>
// kernel: tpu_custom_call.1
$region0: #{tpu_custom_call.1}
  #allocation0 [shape = 'u32[]', space=smem, size = 0x4, offset = 0x4, fixed_abs, tag = 'smem constant byte address 0x4 - core index']
  #allocation1 [shape = 'u32[144,128]{1,0:T(1,128)}', space=vmem, size = 0x12000, scoped, tag = 'internal scratch']
  %s0 = inlined_call_operand.hbm [shape: f32[8,32], index: 0, kind: input, shape index: {}]
  %s1 = inlined_call_operand.hbm [shape: f32[32,32], index: 1, kind: input, shape index: {}]
  %s2 = inlined_call_operand.vmem [shape: f32[3,32], index: 2, kind: input, shape index: {}]
  %s3 = inlined_call_operand.hbm [shape: f32[32,128], index: 3, kind: input, shape index: {}]
  %s4 = inlined_call_operand.vmem [shape: f32[1,128], index: 4, kind: input, shape index: {}]
  %s5 = inlined_call_operand.hbm [shape: f32[8,128], index: 5, kind: output, shape index: {}]
  %s6 = sld [smem:[#allocation0]]
  $region42: #{tpu_custom_call.1} parent=0
    _
  %s8 = ssub.s32 1, %s6
  %s9 = scalar_select 0, %s8, %s6
  $region1: #{tpu_custom_call.1} parent=0
    #allocation2 [shape = 'u8[4096]{0}', space=vmem, size = 0x1000, scoped, tag = 'input window, operand 0, single buffered']
    #allocation3 [shape = 's32[1]{0}', space=sflag, size = 0x4, scoped, tag = 'scoped memory for tpu_custom_call.1']
    #allocation4 [shape = 's32[1]{0}', space=sflag, size = 0x4, scoped, tag = 'scoped memory for tpu_custom_call.1']
    #allocation5 [shape = 'u8[16384]{0}', space=vmem, size = 0x4000, scoped, tag = 'input window, operand 1, single buffered']
    #allocation6 [shape = 's32[1]{0}', space=sflag, size = 0x4, scoped, tag = 'scoped memory for tpu_custom_call.1']
    #allocation7 [shape = 'u8[16384]{0}', space=vmem, size = 0x4000, scoped, tag = 'input window, operand 3, single buffered']
    #allocation8 [shape = 'u8[4096]{0}', space=vmem, size = 0x1000, scoped, tag = 'output window, operand 0, single buffered']
    %10 = vsyncpa [#allocation3], 0
    %11 = vsyncpa [#allocation6], 0
    %12 = vsyncpa [#allocation4], 0
    // Predicated region
    $region2: #{tpu_custom_call.1} parent=1 // pred_check
      _
    $region3: #{tpu_custom_call.1} parent=1 // pred_check_branch
      %14 = sbr.rel (0) target = $region5
    $region4: #{tpu_custom_call.1} parent=1 // pred_region
      %s16 = ssub.s32 128, 128
      %17 = vsyncadd [#allocation3], %s16
      %s19 = sshll.u32 [#allocation2], 4
      %s20 = int_to_ptr.vmem [resolvable:$true] %s19
      %22 = dma.hbm_to_vmem [thread:$0]  %s0, 128, %s20, [#allocation3]
    $region5: #{tpu_custom_call.1} parent=1 // pred_fallthru
      _
    // Predicated region
    $region6: #{tpu_custom_call.1} parent=1 // pred_check
      _
    $region7: #{tpu_custom_call.1} parent=1 // pred_check_branch
      %24 = sbr.rel (0) target = $region9
    $region8: #{tpu_custom_call.1} parent=1 // pred_region
      %s26 = ssub.s32 512, 512
      %27 = vsyncadd [#allocation6], %s26
      %s28 = sshll.u32 [#allocation5], 4
      %s29 = int_to_ptr.vmem [resolvable:$true] %s28
      %34 = dma.hbm_to_vmem [thread:$0]  %s1, 512, %s29, [#allocation6], 128, 128, 8
    $region9: #{tpu_custom_call.1} parent=1 // pred_fallthru
      _
    // Predicated region
    $region10: #{tpu_custom_call.1} parent=1 // pred_check
      _
    $region11: #{tpu_custom_call.1} parent=1 // pred_check_branch
      %36 = sbr.rel (0) target = $region13
    $region12: #{tpu_custom_call.1} parent=1 // pred_region
      _
    $region13: #{tpu_custom_call.1} parent=1 // pred_fallthru
      _
    // Predicated region
    $region14: #{tpu_custom_call.1} parent=1 // pred_check
      _
    $region15: #{tpu_custom_call.1} parent=1 // pred_check_branch
      %38 = sbr.rel (0) target = $region17
    $region16: #{tpu_custom_call.1} parent=1 // pred_region
      %s40 = ssub.s32 512, 512
      %41 = vsyncadd [#allocation6], %s40
      %s42 = sshll.u32 [#allocation7], 4
      %s43 = int_to_ptr.vmem [resolvable:$true] %s42
      %48 = dma.hbm_to_vmem [thread:$0]  %s3, 512, %s43, [#allocation6], 128, 128, 8
    $region17: #{tpu_custom_call.1} parent=1 // pred_fallthru
      _
    // Predicated region
    $region18: #{tpu_custom_call.1} parent=1 // pred_check
      _
    $region19: #{tpu_custom_call.1} parent=1 // pred_check_branch
      %50 = sbr.rel (0) target = $region21
    $region20: #{tpu_custom_call.1} parent=1 // pred_region
      _
    $region21: #{tpu_custom_call.1} parent=1 // pred_fallthru
      _
    // Predicated region
    $region22: #{tpu_custom_call.1} parent=1 // pred_check
      _
    $region23: #{tpu_custom_call.1} parent=1 // pred_check_branch
      %52 = sbr.rel (0) target = $region25
    $region24: #{tpu_custom_call.1} parent=1 // pred_region
      %53 = dma.done [#allocation3], 128
    $region25: #{tpu_custom_call.1} parent=1 // pred_fallthru
      _
    // Predicated region
    $region26: #{tpu_custom_call.1} parent=1 // pred_check
      _
    $region27: #{tpu_custom_call.1} parent=1 // pred_check_branch
      %55 = sbr.rel (0) target = $region29
    $region28: #{tpu_custom_call.1} parent=1 // pred_region
      %56 = dma.done [#allocation6], 512
    $region29: #{tpu_custom_call.1} parent=1 // pred_fallthru
      _
    // Predicated region
    $region30: #{tpu_custom_call.1} parent=1 // pred_check
      _
    $region31: #{tpu_custom_call.1} parent=1 // pred_check_branch
      %58 = sbr.rel (0) target = $region33
    $region32: #{tpu_custom_call.1} parent=1 // pred_region
      %59 = dma.done [#allocation6], 512
    $region33: #{tpu_custom_call.1} parent=1 // pred_fallthru
      _
    %v60 = vld [vmem:[#allocation2] sm:$0xff]
    %v61 = vld [vmem:[#allocation5] sm:$0xff]
    %v62 = vld [vmem:[#allocation5 + $0x8] sm:$0xff]
    %v63 = vld [vmem:[#allocation5 + $0x10] sm:$0xff]
    %v64 = vld [vmem:[#allocation5 + $0x18] sm:$0xff]
    %v65 = vld [vmem:[%s2] sm:$0x1]
    %v66 = vlaneseq
    %v67 = vshrl.u32 %v66, 7
    %v68 = vsub.s32 0, %v67
    %v69 = vrot.slane %v65, %v68
    %vm70 = vcmask 261120
    %v72 = vsel %vm70, %v60, 0
    %74 = vmatprep.subr.mxu0 0.0
    %75 = vmatpush1.msra.mxu0 %v61
    %76 = vmatprep.subr.mxu0 0.0
    %77 = vmatpush1.msra.mxu0 %v62
    %78 = vmatprep.subr.mxu0 0.0
    %79 = vmatpush1.msra.mxu0 %v63
    %80 = vmatprep.subr.mxu0 0.0
    %81 = vmatpush1.msra.mxu0 %v64
    %82 = vmatprep.subr.mxu0 0.0
    %83 = vmatpush1.msra.mxu0 0.0
    %84 = vmatprep.subr.mxu0 0.0
    %85 = vmatpush1.msra.mxu0 0.0
    %86 = vmatprep.subr.mxu0 0.0
    %87 = vmatpush1.msra.mxu0 0.0
    %88 = vmatprep.subr.mxu0 0.0
    %89 = vmatpush1.msra.mxu0 0.0
    %90 = vmatprep.subr.mxu0 0.0
    %91 = vmatpush1.msra.mxu0 0.0
    %92 = vmatprep.subr.mxu0 0.0
    %93 = vmatpush1.msra.mxu0 0.0
    %94 = vmatprep.subr.mxu0 0.0
    %95 = vmatpush1.msra.mxu0 0.0
    %96 = vmatprep.subr.mxu0 0.0
    %97 = vmatpush1.msra.mxu0 0.0
    %98 = vmatprep.subr.mxu0 0.0
    %99 = vmatpush1.msra.mxu0 0.0
    %100 = vmatprep.subr.mxu0 0.0
    %101 = vmatpush1.msra.mxu0 0.0
    %102 = vmatprep.subr.mxu0 0.0
    %103 = vmatpush1.msra.mxu0 0.0
    %104 = vmatprep.subr.mxu0 0.0
    %105 = vmatpush1.msra.mxu0 0.0
    %106 = vmatprep.subr.mxu0 0.0
    %107 = vmatpush1.msra.mxu0 0.0
    %108 = vmatprep.subr.mxu0 0.0
    %109 = vmatpush1.msra.mxu0 0.0
    %110 = vmatprep.subr.mxu0 0.0
    %111 = vmatpush1.msra.mxu0 0.0
    %112 = vmatprep.subr.mxu0 0.0
    %113 = vmatpush1.msra.mxu0 0.0
    %114 = vmatprep.subr.mxu0 0.0
    %115 = vmatpush1.msra.mxu0 0.0
    %116 = vmatprep.subr.mxu0 0.0
    %117 = vmatpush1.msra.mxu0 0.0
    %118 = vmatprep.subr.mxu0 0.0
    %119 = vmatpush1.msra.mxu0 0.0
    %120 = vmatprep.subr.mxu0 0.0
    %121 = vmatpush1.msra.mxu0 0.0
    %122 = vmatprep.subr.mxu0 0.0
    %123 = vmatpush1.msra.mxu0 0.0
    %124 = vmatprep.subr.mxu0 0.0
    %125 = vmatpush1.msra.mxu0 0.0
    %126 = vmatprep.subr.mxu0 0.0
    %127 = vmatpush1.msra.mxu0 0.0
    %128 = vmatprep.subr.mxu0 0.0
    %129 = vmatpush1.msra.mxu0 0.0
    %130 = vmatprep.subr.mxu0 0.0
    %131 = vmatpush1.msra.mxu0 0.0
    %132 = vmatprep.subr.mxu0 0.0
    %133 = vmatpush1.msra.mxu0 0.0
    %134 = vmatprep.subr.mxu0 0.0
    %135 = vmatpush1.msra.mxu0 0.0
    %136 = vmatprep.subr.mxu0 0.0
    %137 = vmatpush1.msra.mxu0 0.0
    %138 = vmatprep.mubr.f32.mxu0 0.0
    %139 = vmatmul.mubr.f32.gmra.mrb[0].mxu0 %v72
    %v140 = vpop.f32.mrb[0].mxu0
    %v141 = vadd.f32 %v69, %v140
    %v142 = vpop.f32.mrb[0].mxu0
    %143 = vdwg.mxu0
    %v144 = vsel %vm70, %v141, 0.0
    %v145 = vrot.slane %v144, 4
    %v146 = vadd.f32 %v144, %v145
    %v147 = vrot.slane %v146, 2
    %v148 = vadd.f32 %v146, %v147
    %v149 = vrot.slane %v148, 1
    %v150 = vadd.f32 %v148, %v149
    %v151 = vmul.f32 %v150, 0.125
    %v152 = vmul.f32 %v141, %v141
    %v153 = vsel %vm70, %v152, 0.0
    %v154 = vrot.slane %v153, 4
    %v155 = vadd.f32 %v153, %v154
    %v156 = vrot.slane %v155, 2
    %v157 = vadd.f32 %v155, %v156
    %v158 = vrot.slane %v157, 1
    %v159 = vadd.f32 %v157, %v158
    %v160 = vmul.f32 %v159, 0.125
    %v161 = vmul.f32 %v151, %v151
    %v162 = vsub.f32 %v160, %v161
    %v163 = vmax.f32 %v162, 0.0
    %v164 = vadd.f32 %v163, 1e-05
    %v165 = vrsqrt.pop %v164
    %v166 = vld [vmem:[%s2 + $0x1] sm:$0x1]
    %v167 = vmul.f32 %v166, %v165
    %v168 = vld [vmem:[%s2 + $0x2] sm:$0x1]
    %v169 = vmul.f32 %v151, %v167
    %v170 = vsub.f32 %v168, %v169
    %v171 = vlaneseq
    %v172 = vshrl.u32 %v171, 7
    %v173 = vsub.s32 0, %v172
    %v174 = vrot.slane %v167, %v173
    %v175 = vmul.f32 %v141, %v174
    %v176 = vlaneseq
    %v177 = vshrl.u32 %v176, 7
    %v178 = vsub.s32 0, %v177
    %v179 = vrot.slane %v170, %v178
    %v180 = vadd.f32 %v175, %v179
    %v181 = vmax.f32 %v180, 0.0
    %v182 = vld [vmem:[#allocation7] sm:$0xff]
    %v183 = vld [vmem:[#allocation7 + $0x8] sm:$0xff]
    %v184 = vld [vmem:[#allocation7 + $0x10] sm:$0xff]
    %v185 = vld [vmem:[#allocation7 + $0x18] sm:$0xff]
    %v186 = vld [vmem:[%s4] sm:$0x1]
    %v188 = vlaneseq
    %v189 = vshrl.u32 %v188, 7
    %v190 = vsub.s32 0, %v189
    %v191 = vrot.slane %v186, %v190
    %v194 = vsel %vm70, %v181, 0
    %196 = vmatprep.subr.mxu0 0.0
    %197 = vmatpush1.msra.mxu0 %v182
    %198 = vmatprep.subr.mxu0 0.0
    %199 = vmatpush1.msra.mxu0 %v183
    %200 = vmatprep.subr.mxu0 0.0
    %201 = vmatpush1.msra.mxu0 %v184
    %202 = vmatprep.subr.mxu0 0.0
    %203 = vmatpush1.msra.mxu0 %v185
    %204 = vmatprep.subr.mxu0 0.0
    %205 = vmatpush1.msra.mxu0 0.0
    %206 = vmatprep.subr.mxu0 0.0
    %207 = vmatpush1.msra.mxu0 0.0
    %208 = vmatprep.subr.mxu0 0.0
    %209 = vmatpush1.msra.mxu0 0.0
    %210 = vmatprep.subr.mxu0 0.0
    %211 = vmatpush1.msra.mxu0 0.0
    %212 = vmatprep.subr.mxu0 0.0
    %213 = vmatpush1.msra.mxu0 0.0
    %214 = vmatprep.subr.mxu0 0.0
    %215 = vmatpush1.msra.mxu0 0.0
    %216 = vmatprep.subr.mxu0 0.0
    %217 = vmatpush1.msra.mxu0 0.0
    %218 = vmatprep.subr.mxu0 0.0
    %219 = vmatpush1.msra.mxu0 0.0
    %220 = vmatprep.subr.mxu0 0.0
    %221 = vmatpush1.msra.mxu0 0.0
    %222 = vmatprep.subr.mxu0 0.0
    %223 = vmatpush1.msra.mxu0 0.0
    %224 = vmatprep.subr.mxu0 0.0
    %225 = vmatpush1.msra.mxu0 0.0
    %226 = vmatprep.subr.mxu0 0.0
    %227 = vmatpush1.msra.mxu0 0.0
    %228 = vmatprep.subr.mxu0 0.0
    %229 = vmatpush1.msra.mxu0 0.0
    %230 = vmatprep.subr.mxu0 0.0
    %231 = vmatpush1.msra.mxu0 0.0
    %232 = vmatprep.subr.mxu0 0.0
    %233 = vmatpush1.msra.mxu0 0.0
    %234 = vmatprep.subr.mxu0 0.0
    %235 = vmatpush1.msra.mxu0 0.0
    %236 = vmatprep.subr.mxu0 0.0
    %237 = vmatpush1.msra.mxu0 0.0
    %238 = vmatprep.subr.mxu0 0.0
    %239 = vmatpush1.msra.mxu0 0.0
    %240 = vmatprep.subr.mxu0 0.0
    %241 = vmatpush1.msra.mxu0 0.0
    %242 = vmatprep.subr.mxu0 0.0
    %243 = vmatpush1.msra.mxu0 0.0
    %244 = vmatprep.subr.mxu0 0.0
    %245 = vmatpush1.msra.mxu0 0.0
    %246 = vmatprep.subr.mxu0 0.0
    %247 = vmatpush1.msra.mxu0 0.0
    %248 = vmatprep.subr.mxu0 0.0
    %249 = vmatpush1.msra.mxu0 0.0
    %250 = vmatprep.subr.mxu0 0.0
    %251 = vmatpush1.msra.mxu0 0.0
    %252 = vmatprep.subr.mxu0 0.0
    %253 = vmatpush1.msra.mxu0 0.0
    %254 = vmatprep.subr.mxu0 0.0
    %255 = vmatpush1.msra.mxu0 0.0
    %256 = vmatprep.subr.mxu0 0.0
    %257 = vmatpush1.msra.mxu0 0.0
    %258 = vmatprep.subr.mxu0 0.0
    %259 = vmatpush1.msra.mxu0 0.0
    %260 = vmatprep.mubr.f32.mxu0 0.0
    %261 = vmatmul.mubr.f32.gmra.mrb[0].mxu0 %v194
    %v262 = vpop.f32.mrb[0].mxu0
    %v263 = vadd.f32 %v191, %v262
    %v264 = vpop.f32.mrb[0].mxu0
    %265 = vdwg.mxu0
    %266 = vst [vmem:[#allocation8] sm:$0xff] %v263
    // Predicated region
    $region34: #{tpu_custom_call.1} parent=1 // pred_check
      _
    $region35: #{tpu_custom_call.1} parent=1 // pred_check_branch
      %268 = sbr.rel (0) target = $region37
    $region36: #{tpu_custom_call.1} parent=1 // pred_region
      %s270 = ssub.s32 128, 128
      %271 = vsyncadd [#allocation4], %s270
      %s273 = sshll.u32 [#allocation8], 4
      %s274 = int_to_ptr.vmem [resolvable:$true] %s273
      %276 = dma.vmem_to_hbm [thread:$0]  %s274, 128, %s5, [#allocation4]
    $region37: #{tpu_custom_call.1} parent=1 // pred_fallthru
      _
    // Predicated region
    $region38: #{tpu_custom_call.1} parent=1 // pred_check
      _
    $region39: #{tpu_custom_call.1} parent=1 // pred_check_branch
      %278 = sbr.rel (0) target = $region41
    $region40: #{tpu_custom_call.1} parent=1 // pred_region
      %279 = dma.done [#allocation4], 128
    $region41: #{tpu_custom_call.1} parent=1 // pred_fallthru
      _
    %280 = vsyncpa [#allocation3], 1
    %281 = vsyncpa [#allocation6], 1
    %282 = vsyncpa [#allocation4], 1

</llo_original>
